<compile_context>
chip_gen: v5e
topology: v5e:2x2
jax: 0.10.0
libtpu: 0.0.40
codegen_flags: <defaults>
</compile_context>

<pallas_src>
import jax
import jax.numpy as jnp
from jax.experimental import pallas as pl
from jax.experimental.pallas import tpu as pltpu


# ----------------------------------------------------------------------------- kernel
def fc_mlp_kernel(x_ref, w1_ref, b1_ref, w2_ref, b2_ref, w3_ref, b3_ref, o_ref):
    """relu(relu(x@W1+b1)@W2+b2)@W3+b3 ; the last FullyConnectedBlock is Identity."""
    x = x_ref[...]
    f0 = x_ref.shape[1]

    if f0 <= 8:
        # Lane-starved contraction (K = f0 <= 8): do it as f0 broadcast-FMAs on the
        # VPU (f32 products / accumulate) instead of feeding <=8 of the MXU's rows.
        w1 = w1_ref[...].astype(jnp.float32)
        h = x[:, 0:1].astype(jnp.float32) * w1[0:1, :] + b1_ref[...].astype(jnp.float32)
        for k in range(1, f0):                            # static, unrolled at trace time
            h = h + x[:, k:k + 1].astype(jnp.float32) * w1[k:k + 1, :]
    else:
        h = (jnp.dot(x, w1_ref[...], preferred_element_type=jnp.float32)
             + b1_ref[...].astype(jnp.float32))
    h = jnp.maximum(h, 0.0)                               # block 1: ReLU

    h = (jnp.dot(h.astype(w2_ref.dtype), w2_ref[...],
                 preferred_element_type=jnp.float32)
         + b2_ref[...].astype(jnp.float32))
    h = jnp.maximum(h, 0.0)                               # block 2: ReLU

    out = (jnp.dot(h.astype(w3_ref.dtype), w3_ref[...],
                   preferred_element_type=jnp.float32)
           + b3_ref[...].astype(jnp.float32))
    o_ref[...] = out.astype(o_ref.dtype)                  # block 3: activation=None


# --------------------------------------------------------------------------- helpers
def _round_up(x, m):
    return ((x + m - 1) // m) * m


def _device_kind():
    try:
        return jax.devices()[0].device_kind.lower()
    except Exception:
        return ""


def _num_tensorcores(kind):
    # v5e / v6e expose 1 TensorCore per chip; v7x exposes 2.
    return 2 if "v7" in kind else 1


def _choose_tiling(batch, num_cores, max_tile=2048):
    """Pick (tile_m, num_steps).

    1-TC chips (v5e/v6e): a single full-batch step whenever it fits max_tile — the
    forced 2-way split buys nothing and just adds per-step overhead + an extra DMA
    pair.  2-TC chips (v7x): an even number of steps so both TensorCores get equal
    work.  tile_m is sublane-(8) aligned; per-step VMEM even at 2048 rows is only a
    few MiB (x tile + f_out-wide out tile, double-buffered).
    """
    b8 = _round_up(max(batch, 1), 8)
    steps = max(1, pl.cdiv(b8, max_tile))
    if num_cores > 1:
        steps = max(2, steps)
        if steps % 2:
            steps += 1
    tile_m = _round_up(pl.cdiv(b8, steps), 8)
    return tile_m, steps


def _resident_spec(arr, single_buffer):
    # Whole-array block with a constant index_map: Pallas keeps it resident in VMEM
    # across grid steps (the block index never changes, so no re-DMA).  Once the
    # resident footprint is big enough to matter against v7x's 64 MiB VMEM, single-
    # buffer it (default double-buffering would pointlessly double its footprint).
    index_map = lambda i: (0,) * arr.ndim
    if single_buffer:
        return pl.BlockSpec(arr.shape, index_map, pipeline_mode=pl.Buffered(1))
    return pl.BlockSpec(arr.shape, index_map)


# --------------------------------------------------------------------------- wrapper
def fc_forward(x, params, *, tile_m=None, compute_dtype=None, max_tile=2048):
    """x: [B, f0]. params: list of (W [f_in, f_out], b [1, f_out]) for the 3 blocks."""
    (w1, b1), (w2, b2), (w3, b3) = params
    B, f0 = x.shape
    f_out = w3.shape[1]

    kind = _device_kind()
    num_cores = _num_tensorcores(kind)
    if compute_dtype is None:
        # bf16 is the MXU's native input on v6e/v7x and halves x/weight DMA bytes;
        # accumulation stays f32 (preferred_element_type), bias/ReLU stay f32, so the
        # v5e path (no bf16 VPU) keeps f32 everywhere by default.
        compute_dtype = jnp.bfloat16 if ("v6" in kind or "v7" in kind) else jnp.float32

    if tile_m is None:
        tile_m, steps = _choose_tiling(B, num_cores, max_tile)
    else:
        tile_m = _round_up(tile_m, 8)
        steps = pl.cdiv(B, tile_m)
        if num_cores > 1 and steps % 2:
            steps += 1
    B_pad = tile_m * steps

    # Cast MXU inputs; biases stay f32 (added post-accumulation).  Output keeps the
    # caller's dtype.
    x_c = x.astype(compute_dtype)
    w1c = w1.astype(compute_dtype)
    w2c = w2.astype(compute_dtype)
    w3c = w3.astype(compute_dtype)

    # Zero-pad ragged batches to exactly tile_m * steps (extra rows sliced back off).
    # When B is already tile-aligned (common case) no pad / no extra HBM pass happens.
    if B_pad != B:
        x_c = jnp.pad(x_c, ((0, B_pad - B), (0, 0)))

    resident_bytes = sum(int(a.size) * a.dtype.itemsize
                         for a in (w1c, w2c, w3c, b1, b2, b3))
    single_buffer = resident_bytes > (2 << 20)

    out = pl.pallas_call(
        fc_mlp_kernel,
        out_shape=jax.ShapeDtypeStruct((B_pad, f_out), x.dtype),
        grid_spec=pltpu.PrefetchScalarGridSpec(
            num_scalar_prefetch=0,
            grid=(steps,),
            in_specs=[
                # x tile over batch rows: one contiguous DMA per step; the narrow f0
                # dim is amortized by the large batch tile.
                pl.BlockSpec((tile_m, f0), lambda i: (i, 0)),
                _resident_spec(w1c, single_buffer), _resident_spec(b1, single_buffer),
                _resident_spec(w2c, single_buffer), _resident_spec(b2, single_buffer),
                _resident_spec(w3c, single_buffer), _resident_spec(b3, single_buffer),
            ],
            # (tile_m, f_out) is legal: f_out equals the full array dim; masked vst is
            # cheaper end-to-end than 16x write amplification + a wrapper slice pass.
            out_specs=pl.BlockSpec((tile_m, f_out), lambda i: (i, 0)),
        ),
        # TODO(synk): verify in xprof that ("parallel",) actually shards the grid
        # across v7x's 2 TensorCores; if not, switch to an explicit leading core axis
        # (P9) or pltpu.CORE_PARALLEL / pl.core_map.
        compiler_params=pltpu.CompilerParams(
            dimension_semantics=("parallel",)),
    )(x_c, w1c, b1, w2c, b2, w3c, b3)

    if B_pad != B:
        out = out[:B]
    return out


# ------------------------------------------------------------------- init & reference
def init_fc_params(key, features):
    """Deterministic init matching init_weights_normal: kaiming_normal_(fan_in, relu), bias=0."""
    params = []
    for i in range(1, len(features)):
        n_in, n_out = features[i - 1], features[i]
        key, sub = jax.random.split(key)
        std = (2.0 / n_in) ** 0.5  # kaiming normal, fan_in mode, relu gain
        # PyTorch weight is [n_out, n_in]; we store the transpose [n_in, n_out] for x @ W.
        w = (jax.random.normal(sub, (n_out, n_in), dtype=jnp.float32) * std).T
        b = jnp.zeros((1, n_out), dtype=jnp.float32)
        params.append((w, b))
    return params


def fc_reference(x, params, compute_dtype=jnp.float32):
    """Pure-JAX reference of the same FC forward (mirrors the kernel's cast points)."""
    (w1, b1), (w2, b2), (w3, b3) = params

    def lin(h, w, b):
        return (jnp.dot(h.astype(compute_dtype), w.astype(compute_dtype),
                        preferred_element_type=jnp.float32)
                + b.astype(jnp.float32))

    h = jnp.maximum(lin(x, w1, b1), 0.0)
    h = jnp.maximum(lin(h, w2, b2), 0.0)
    return lin(h, w3, b3)


# ------------------------------------------------------------------------------ main
if __name__ == "__main__":
    # FC(features=[4, 32, 32, 8]) built from FullyConnectedBlock layers:
    # ReLU on the two hidden blocks, Identity (activation=None) on the last.
    features = [4, 32, 32, 8]

    key = jax.random.PRNGKey(0)
    key_x, key_p = jax.random.split(key)
    params = init_fc_params(key_p, features)

    kind = _device_kind()
    default_dtype = jnp.bfloat16 if ("v6" in kind or "v7" in kind) else jnp.float32
    tol = 1e-5 if default_dtype == jnp.float32 else 1e-2

    # 1) Even batch, auto tiling (single step on v5e/v6e, two core-sharded steps on v7x).
    batch = 64
    x = jax.random.normal(key_x, (batch, features[0]), dtype=jnp.float32)
    out = jax.block_until_ready(fc_forward(x, params))
    ref = fc_reference(x, params, compute_dtype=default_dtype)
    assert out.shape == (batch, features[-1])
    assert jnp.allclose(out, ref, atol=tol, rtol=tol), "Pallas output mismatch (auto path)"

    # 2) Forced multi-step grid + pure f32 compute (tight tolerance): exercises the
    #    per-step x/out DMA pipeline across several grid steps.
    out32 = jax.block_until_ready(
        fc_forward(x, params, tile_m=32, compute_dtype=jnp.float32))
    ref32 = fc_reference(x, params, compute_dtype=jnp.float32)
    assert jnp.allclose(out32, ref32, atol=1e-5, rtol=1e-5), "Pallas output mismatch (f32 tiled)"

    # 3) Ragged batch: exercises the zero-pad + row-slice path (no divisibility assert).
    batch2 = 10
    x2 = jax.random.normal(key_x, (batch2, features[0]), dtype=jnp.float32)
    out2 = jax.block_until_ready(
        fc_forward(x2, params, compute_dtype=jnp.float32))
    ref2 = fc_reference(x2, params, compute_dtype=jnp.float32)
    assert out2.shape == (batch2, features[-1])
    assert jnp.allclose(out2, ref2, atol=1e-5, rtol=1e-5), "Pallas output mismatch (ragged batch)"

    print("KERNEL_OK")
</pallas_src>

<mosaic_0001>
module attributes {stable_mosaic.version = 11 : i64} {
  func.func @fc_mlp_kernel(%arg0: i32, %arg1: memref<64x4xf32, #tpu.memory_space<vmem>>, %arg2: memref<4x32xf32, #tpu.memory_space<vmem>>, %arg3: memref<1x32xf32, #tpu.memory_space<vmem>>, %arg4: memref<32x32xf32, #tpu.memory_space<vmem>>, %arg5: memref<1x32xf32, #tpu.memory_space<vmem>>, %arg6: memref<32x8xf32, #tpu.memory_space<vmem>>, %arg7: memref<1x8xf32, #tpu.memory_space<vmem>>, %arg8: memref<64x8xf32, #tpu.memory_space<vmem>>) attributes {dimension_semantics = [#tpu.dimension_semantics<parallel>], iteration_bounds = array<i64: 1>, scalar_prefetch = 0 : i64, scratch_operands = 0 : i64, tpu.core_type = #tpu.core_type<tc>, window_params = [{transform_indices = @transform_0, window_bounds = array<i64: 64, 4>}, {pipeline_mode = #tpu.pipeline_mode<synchronous>, transform_indices = @transform_1, window_bounds = array<i64: 4, 32>}, {pipeline_mode = #tpu.pipeline_mode<synchronous>, transform_indices = @transform_2, window_bounds = array<i64: 1, 32>}, {pipeline_mode = #tpu.pipeline_mode<synchronous>, transform_indices = @transform_3, window_bounds = array<i64: 32, 32>}, {pipeline_mode = #tpu.pipeline_mode<synchronous>, transform_indices = @transform_4, window_bounds = array<i64: 1, 32>}, {pipeline_mode = #tpu.pipeline_mode<synchronous>, transform_indices = @transform_5, window_bounds = array<i64: 32, 8>}, {pipeline_mode = #tpu.pipeline_mode<synchronous>, transform_indices = @transform_6, window_bounds = array<i64: 1, 8>}, {transform_indices = @transform_7, window_bounds = array<i64: 64, 8>}]} {
    %c0 = arith.constant 0 : index
    %c0_0 = arith.constant 0 : index
    %0 = vector.load %arg1[%c0, %c0_0] : memref<64x4xf32, #tpu.memory_space<vmem>>, vector<64x4xf32>
    %c0_1 = arith.constant 0 : index
    %c0_2 = arith.constant 0 : index
    %1 = vector.load %arg2[%c0_1, %c0_2] : memref<4x32xf32, #tpu.memory_space<vmem>>, vector<4x32xf32>
    %2 = vector.extract_strided_slice %0 {offsets = [0, 0], sizes = [64, 1], strides = [1, 1]} : vector<64x4xf32> to vector<64x1xf32>
    %3 = vector.extract_strided_slice %1 {offsets = [0, 0], sizes = [1, 32], strides = [1, 1]} : vector<4x32xf32> to vector<1x32xf32>
    %4 = vector.broadcast %2 : vector<64x1xf32> to vector<64x32xf32>
    %5 = vector.broadcast %3 : vector<1x32xf32> to vector<64x32xf32>
    %6 = arith.mulf %4, %5 : vector<64x32xf32>
    %c0_3 = arith.constant 0 : index
    %c0_4 = arith.constant 0 : index
    %7 = vector.load %arg3[%c0_3, %c0_4] : memref<1x32xf32, #tpu.memory_space<vmem>>, vector<1x32xf32>
    %8 = vector.broadcast %7 : vector<1x32xf32> to vector<64x32xf32>
    %9 = arith.addf %6, %8 : vector<64x32xf32>
    %10 = vector.extract_strided_slice %0 {offsets = [0, 1], sizes = [64, 1], strides = [1, 1]} : vector<64x4xf32> to vector<64x1xf32>
    %11 = vector.extract_strided_slice %1 {offsets = [1, 0], sizes = [1, 32], strides = [1, 1]} : vector<4x32xf32> to vector<1x32xf32>
    %12 = vector.broadcast %10 : vector<64x1xf32> to vector<64x32xf32>
    %13 = vector.broadcast %11 : vector<1x32xf32> to vector<64x32xf32>
    %14 = arith.mulf %12, %13 : vector<64x32xf32>
    %15 = arith.addf %9, %14 : vector<64x32xf32>
    %16 = vector.extract_strided_slice %0 {offsets = [0, 2], sizes = [64, 1], strides = [1, 1]} : vector<64x4xf32> to vector<64x1xf32>
    %17 = vector.extract_strided_slice %1 {offsets = [2, 0], sizes = [1, 32], strides = [1, 1]} : vector<4x32xf32> to vector<1x32xf32>
    %18 = vector.broadcast %16 : vector<64x1xf32> to vector<64x32xf32>
    %19 = vector.broadcast %17 : vector<1x32xf32> to vector<64x32xf32>
    %20 = arith.mulf %18, %19 : vector<64x32xf32>
    %21 = arith.addf %15, %20 : vector<64x32xf32>
    %22 = vector.extract_strided_slice %0 {offsets = [0, 3], sizes = [64, 1], strides = [1, 1]} : vector<64x4xf32> to vector<64x1xf32>
    %23 = vector.extract_strided_slice %1 {offsets = [3, 0], sizes = [1, 32], strides = [1, 1]} : vector<4x32xf32> to vector<1x32xf32>
    %24 = vector.broadcast %22 : vector<64x1xf32> to vector<64x32xf32>
    %25 = vector.broadcast %23 : vector<1x32xf32> to vector<64x32xf32>
    %26 = arith.mulf %24, %25 : vector<64x32xf32>
    %27 = arith.addf %21, %26 : vector<64x32xf32>
    %cst = arith.constant 0.000000e+00 : f32
    %28 = vector.broadcast %cst : f32 to vector<64x32xf32>
    %29 = arith.maximumf %27, %28 : vector<64x32xf32>
    %c0_5 = arith.constant 0 : index
    %c0_6 = arith.constant 0 : index
    %30 = vector.load %arg4[%c0_5, %c0_6] : memref<32x32xf32, #tpu.memory_space<vmem>>, vector<32x32xf32>
    %cst_7 = arith.constant dense<0.000000e+00> : vector<64x32xf32>
    %31 = tpu.matmul %29, %30, %cst_7 {dimension_numbers = #tpu.dot_dimension_numbers<[1], [0], [0], [1], [0, 0, 1, 1], [], []>} : vector<64x32xf32>, vector<32x32xf32>, vector<64x32xf32> -> vector<64x32xf32>
    %c0_8 = arith.constant 0 : index
    %c0_9 = arith.constant 0 : index
    %32 = vector.load %arg5[%c0_8, %c0_9] : memref<1x32xf32, #tpu.memory_space<vmem>>, vector<1x32xf32>
    %33 = vector.broadcast %32 : vector<1x32xf32> to vector<64x32xf32>
    %34 = arith.addf %31, %33 : vector<64x32xf32>
    %cst_10 = arith.constant 0.000000e+00 : f32
    %35 = vector.broadcast %cst_10 : f32 to vector<64x32xf32>
    %36 = arith.maximumf %34, %35 : vector<64x32xf32>
    %c0_11 = arith.constant 0 : index
    %c0_12 = arith.constant 0 : index
    %37 = vector.load %arg6[%c0_11, %c0_12] : memref<32x8xf32, #tpu.memory_space<vmem>>, vector<32x8xf32>
    %cst_13 = arith.constant dense<0.000000e+00> : vector<64x8xf32>
    %38 = tpu.matmul %36, %37, %cst_13 {dimension_numbers = #tpu.dot_dimension_numbers<[1], [0], [0], [1], [0, 0, 1, 1], [], []>} : vector<64x32xf32>, vector<32x8xf32>, vector<64x8xf32> -> vector<64x8xf32>
    %c0_14 = arith.constant 0 : index
    %c0_15 = arith.constant 0 : index
    %39 = vector.load %arg7[%c0_14, %c0_15] : memref<1x8xf32, #tpu.memory_space<vmem>>, vector<1x8xf32>
    %40 = vector.broadcast %39 : vector<1x8xf32> to vector<64x8xf32>
    %41 = arith.addf %38, %40 : vector<64x8xf32>
    %c0_16 = arith.constant 0 : index
    %c0_17 = arith.constant 0 : index
    %42 = vector.load %arg8[%c0_16, %c0_17] : memref<64x8xf32, #tpu.memory_space<vmem>>, vector<64x8xf32>
    tpu.vector_store %arg8[%c0_16, %c0_17], %41 {strides = array<i32>} : memref<64x8xf32, #tpu.memory_space<vmem>>, vector<64x8xf32>,
    return
  }
  func.func @transform_0(%arg0: i32) -> (i32, i32) {
    %c0_i32 = arith.constant 0 : i32
    %c0_i32_0 = arith.constant 0 : i32
    return %arg0, %c0_i32 : i32, i32
  }
  func.func @transform_1(%arg0: i32) -> (i32, i32) {
    %c0_i32 = arith.constant 0 : i32
    %c0_i32_0 = arith.constant 0 : i32
    %c0_i32_1 = arith.constant 0 : i32
    return %c0_i32, %c0_i32_0 : i32, i32
  }
  func.func @transform_2(%arg0: i32) -> (i32, i32) {
    %c0_i32 = arith.constant 0 : i32
    %c0_i32_0 = arith.constant 0 : i32
    %c0_i32_1 = arith.constant 0 : i32
    return %c0_i32, %c0_i32_0 : i32, i32
  }
  func.func @transform_3(%arg0: i32) -> (i32, i32) {
    %c0_i32 = arith.constant 0 : i32
    %c0_i32_0 = arith.constant 0 : i32
    %c0_i32_1 = arith.constant 0 : i32
    return %c0_i32, %c0_i32_0 : i32, i32
  }
  func.func @transform_4(%arg0: i32) -> (i32, i32) {
    %c0_i32 = arith.constant 0 : i32
    %c0_i32_0 = arith.constant 0 : i32
    %c0_i32_1 = arith.constant 0 : i32
    return %c0_i32, %c0_i32_0 : i32, i32
  }
  func.func @transform_5(%arg0: i32) -> (i32, i32) {
    %c0_i32 = arith.constant 0 : i32
    %c0_i32_0 = arith.constant 0 : i32
    %c0_i32_1 = arith.constant 0 : i32
    return %c0_i32, %c0_i32_0 : i32, i32
  }
  func.func @transform_6(%arg0: i32) -> (i32, i32) {
    %c0_i32 = arith.constant 0 : i32
    %c0_i32_0 = arith.constant 0 : i32
    %c0_i32_1 = arith.constant 0 : i32
    return %c0_i32, %c0_i32_0 : i32, i32
  }
  func.func @transform_7(%arg0: i32) -> (i32, i32) {
    %c0_i32 = arith.constant 0 : i32
    %c0_i32_0 = arith.constant 0 : i32
    return %arg0, %c0_i32 : i32, i32
  }
}

</mosaic_0001>

<llo_original>
// kernel: tpu_custom_call.1
$region0: #{tpu_custom_call.1}
  #allocation0 [shape = 'u32[]', space=smem, size = 0x4, offset = 0x4, fixed_abs, tag = 'smem constant byte address 0x4 - core index']
  #allocation1 [shape = 'u32[72,128]{1,0:T(1,128)}', space=vmem, size = 0x9000, scoped, tag = 'internal scratch']
  %s0 = inlined_call_operand.vmem [shape: f32[64,4], index: 0, kind: input, shape index: {}]
  %s1 = inlined_call_operand.vmem [shape: f32[4,32], index: 1, kind: input, shape index: {}]
  %s2 = inlined_call_operand.vmem [shape: f32[1,32], index: 2, kind: input, shape index: {}]
  %s3 = inlined_call_operand.vmem [shape: f32[32,32], index: 3, kind: input, shape index: {}]
  %s4 = inlined_call_operand.vmem [shape: f32[1,32], index: 4, kind: input, shape index: {}]
  %s5 = inlined_call_operand.vmem [shape: f32[32,8], index: 5, kind: input, shape index: {}]
  %s6 = inlined_call_operand.vmem [shape: f32[1,8], index: 6, kind: input, shape index: {}]
  %s7 = inlined_call_operand.vmem [shape: f32[64,8], index: 7, kind: output, shape index: {}]
  %s8 = sld [smem:[#allocation0]]
  $region38: #{tpu_custom_call.1} parent=0
    _
  %s10 = ssub.s32 1, %s8
  %s11 = scalar_select 0, %s10, %s8
  // Predicated region
  $region2: #{tpu_custom_call.1} parent=0 // pred_check
    _
  $region3: #{tpu_custom_call.1} parent=0 // pred_check_branch
    %13 = sbr.rel (0) target = $region5
  $region4: #{tpu_custom_call.1} parent=0 // pred_region
    _
  $region5: #{tpu_custom_call.1} parent=0 // pred_fallthru
    _
  // Predicated region
  $region6: #{tpu_custom_call.1} parent=0 // pred_check
    _
  $region7: #{tpu_custom_call.1} parent=0 // pred_check_branch
    %15 = sbr.rel (0) target = $region9
  $region8: #{tpu_custom_call.1} parent=0 // pred_region
    _
  $region9: #{tpu_custom_call.1} parent=0 // pred_fallthru
    _
  // Predicated region
  $region10: #{tpu_custom_call.1} parent=0 // pred_check
    _
  $region11: #{tpu_custom_call.1} parent=0 // pred_check_branch
    %17 = sbr.rel (0) target = $region13
  $region12: #{tpu_custom_call.1} parent=0 // pred_region
    _
  $region13: #{tpu_custom_call.1} parent=0 // pred_fallthru
    _
  // Predicated region
  $region14: #{tpu_custom_call.1} parent=0 // pred_check
    _
  $region15: #{tpu_custom_call.1} parent=0 // pred_check_branch
    %19 = sbr.rel (0) target = $region17
  $region16: #{tpu_custom_call.1} parent=0 // pred_region
    _
  $region17: #{tpu_custom_call.1} parent=0 // pred_fallthru
    _
  // Predicated region
  $region18: #{tpu_custom_call.1} parent=0 // pred_check
    _
  $region19: #{tpu_custom_call.1} parent=0 // pred_check_branch
    %21 = sbr.rel (0) target = $region21
  $region20: #{tpu_custom_call.1} parent=0 // pred_region
    _
  $region21: #{tpu_custom_call.1} parent=0 // pred_fallthru
    _
  // Predicated region
  $region22: #{tpu_custom_call.1} parent=0 // pred_check
    _
  $region23: #{tpu_custom_call.1} parent=0 // pred_check_branch
    %23 = sbr.rel (0) target = $region25
  $region24: #{tpu_custom_call.1} parent=0 // pred_region
    _
  $region25: #{tpu_custom_call.1} parent=0 // pred_fallthru
    _
  // Predicated region
  $region26: #{tpu_custom_call.1} parent=0 // pred_check
    _
  $region27: #{tpu_custom_call.1} parent=0 // pred_check_branch
    %25 = sbr.rel (0) target = $region29
  $region28: #{tpu_custom_call.1} parent=0 // pred_region
    _
  $region29: #{tpu_custom_call.1} parent=0 // pred_fallthru
    _
  %v26 = vld [vmem:[%s0] sm:$0xff]
  %v27 = vld [vmem:[%s0 + $0x8] sm:$0xff]
  %v28 = vld [vmem:[%s0 + $0x10] sm:$0xff]
  %v29 = vld [vmem:[%s0 + $0x18] sm:$0xff]
  %v30 = vld [vmem:[%s0 + $0x20] sm:$0xff]
  %v31 = vld [vmem:[%s0 + $0x28] sm:$0xff]
  %v32 = vld [vmem:[%s0 + $0x30] sm:$0xff]
  %v33 = vld [vmem:[%s0 + $0x38] sm:$0xff]
  %v34 = vld [vmem:[%s1] sm:$0xf]
  %36 = vset.pattern.permute.xlu0 0
  %37 = vperm.xlu0 %36, %v26
  %v38 = vpop.permute.xlu0 %37
  %41 = vset.pattern.permute.xlu0 0
  %42 = vperm.xlu0 %41, %v27
  %v43 = vpop.permute.xlu0 %42
  %46 = vset.pattern.permute.xlu0 0
  %47 = vperm.xlu0 %46, %v28
  %v48 = vpop.permute.xlu0 %47
  %51 = vset.pattern.permute.xlu0 0
  %52 = vperm.xlu0 %51, %v29
  %v53 = vpop.permute.xlu0 %52
  %56 = vset.pattern.permute.xlu0 0
  %57 = vperm.xlu0 %56, %v30
  %v58 = vpop.permute.xlu0 %57
  %61 = vset.pattern.permute.xlu0 0
  %62 = vperm.xlu0 %61, %v31
  %v63 = vpop.permute.xlu0 %62
  %66 = vset.pattern.permute.xlu0 0
  %67 = vperm.xlu0 %66, %v32
  %v68 = vpop.permute.xlu0 %67
  %71 = vset.pattern.permute.xlu0 0
  %72 = vperm.xlu0 %71, %v33
  %v73 = vpop.permute.xlu0 %72
  %v75 = vperm.slane %v34, 0
  %v76 = vmul.f32 %v38, %v75
  %v77 = vmul.f32 %v43, %v75
  %v78 = vmul.f32 %v48, %v75
  %v79 = vmul.f32 %v53, %v75
  %v80 = vmul.f32 %v58, %v75
  %v81 = vmul.f32 %v63, %v75
  %v82 = vmul.f32 %v68, %v75
  %v83 = vmul.f32 %v73, %v75
  %v84 = vld [vmem:[%s2] sm:$0x1]
  %v86 = vperm.slane %v84, 0
  %v88 = vadd.f32 %v76, %v86
  %v89 = vadd.f32 %v77, %v86
  %v90 = vadd.f32 %v78, %v86
  %v91 = vadd.f32 %v79, %v86
  %v92 = vadd.f32 %v80, %v86
  %v93 = vadd.f32 %v81, %v86
  %v94 = vadd.f32 %v82, %v86
  %v95 = vadd.f32 %v83, %v86
  %96 = vset.pattern.permute.xlu0 1
  %97 = vperm.xlu0 %96, %v26
  %v98 = vpop.permute.xlu0 %97
  %100 = vset.pattern.permute.xlu0 1
  %101 = vperm.xlu0 %100, %v27
  %v102 = vpop.permute.xlu0 %101
  %104 = vset.pattern.permute.xlu0 1
  %105 = vperm.xlu0 %104, %v28
  %v106 = vpop.permute.xlu0 %105
  %108 = vset.pattern.permute.xlu0 1
  %109 = vperm.xlu0 %108, %v29
  %v110 = vpop.permute.xlu0 %109
  %112 = vset.pattern.permute.xlu0 1
  %113 = vperm.xlu0 %112, %v30
  %v114 = vpop.permute.xlu0 %113
  %116 = vset.pattern.permute.xlu0 1
  %117 = vperm.xlu0 %116, %v31
  %v118 = vpop.permute.xlu0 %117
  %120 = vset.pattern.permute.xlu0 1
  %121 = vperm.xlu0 %120, %v32
  %v122 = vpop.permute.xlu0 %121
  %124 = vset.pattern.permute.xlu0 1
  %125 = vperm.xlu0 %124, %v33
  %v126 = vpop.permute.xlu0 %125
  %v128 = vperm.slane %v34, 1
  %v129 = vmul.f32 %v98, %v128
  %v130 = vmul.f32 %v102, %v128
  %v131 = vmul.f32 %v106, %v128
  %v132 = vmul.f32 %v110, %v128
  %v133 = vmul.f32 %v114, %v128
  %v134 = vmul.f32 %v118, %v128
  %v135 = vmul.f32 %v122, %v128
  %v136 = vmul.f32 %v126, %v128
  %v137 = vadd.f32 %v88, %v129
  %v138 = vadd.f32 %v89, %v130
  %v139 = vadd.f32 %v90, %v131
  %v140 = vadd.f32 %v91, %v132
  %v141 = vadd.f32 %v92, %v133
  %v142 = vadd.f32 %v93, %v134
  %v143 = vadd.f32 %v94, %v135
  %v144 = vadd.f32 %v95, %v136
  %145 = vset.pattern.permute.xlu0 2
  %146 = vperm.xlu0 %145, %v26
  %v147 = vpop.permute.xlu0 %146
  %149 = vset.pattern.permute.xlu0 2
  %150 = vperm.xlu0 %149, %v27
  %v151 = vpop.permute.xlu0 %150
  %153 = vset.pattern.permute.xlu0 2
  %154 = vperm.xlu0 %153, %v28
  %v155 = vpop.permute.xlu0 %154
  %157 = vset.pattern.permute.xlu0 2
  %158 = vperm.xlu0 %157, %v29
  %v159 = vpop.permute.xlu0 %158
  %161 = vset.pattern.permute.xlu0 2
  %162 = vperm.xlu0 %161, %v30
  %v163 = vpop.permute.xlu0 %162
  %165 = vset.pattern.permute.xlu0 2
  %166 = vperm.xlu0 %165, %v31
  %v167 = vpop.permute.xlu0 %166
  %169 = vset.pattern.permute.xlu0 2
  %170 = vperm.xlu0 %169, %v32
  %v171 = vpop.permute.xlu0 %170
  %173 = vset.pattern.permute.xlu0 2
  %174 = vperm.xlu0 %173, %v33
  %v175 = vpop.permute.xlu0 %174
  %v177 = vperm.slane %v34, 2
  %v178 = vmul.f32 %v147, %v177
  %v179 = vmul.f32 %v151, %v177
  %v180 = vmul.f32 %v155, %v177
  %v181 = vmul.f32 %v159, %v177
  %v182 = vmul.f32 %v163, %v177
  %v183 = vmul.f32 %v167, %v177
  %v184 = vmul.f32 %v171, %v177
  %v185 = vmul.f32 %v175, %v177
  %v186 = vadd.f32 %v137, %v178
  %v187 = vadd.f32 %v138, %v179
  %v188 = vadd.f32 %v139, %v180
  %v189 = vadd.f32 %v140, %v181
  %v190 = vadd.f32 %v141, %v182
  %v191 = vadd.f32 %v142, %v183
  %v192 = vadd.f32 %v143, %v184
  %v193 = vadd.f32 %v144, %v185
  %194 = vset.pattern.permute.xlu0 3
  %195 = vperm.xlu0 %194, %v26
  %v196 = vpop.permute.xlu0 %195
  %198 = vset.pattern.permute.xlu0 3
  %199 = vperm.xlu0 %198, %v27
  %v200 = vpop.permute.xlu0 %199
  %202 = vset.pattern.permute.xlu0 3
  %203 = vperm.xlu0 %202, %v28
  %v204 = vpop.permute.xlu0 %203
  %206 = vset.pattern.permute.xlu0 3
  %207 = vperm.xlu0 %206, %v29
  %v208 = vpop.permute.xlu0 %207
  %210 = vset.pattern.permute.xlu0 3
  %211 = vperm.xlu0 %210, %v30
  %v212 = vpop.permute.xlu0 %211
  %214 = vset.pattern.permute.xlu0 3
  %215 = vperm.xlu0 %214, %v31
  %v216 = vpop.permute.xlu0 %215
  %218 = vset.pattern.permute.xlu0 3
  %219 = vperm.xlu0 %218, %v32
  %v220 = vpop.permute.xlu0 %219
  %222 = vset.pattern.permute.xlu0 3
  %223 = vperm.xlu0 %222, %v33
  %v224 = vpop.permute.xlu0 %223
  %v226 = vperm.slane %v34, 3
  %v227 = vmul.f32 %v196, %v226
  %v228 = vmul.f32 %v200, %v226
  %v229 = vmul.f32 %v204, %v226
  %v230 = vmul.f32 %v208, %v226
  %v231 = vmul.f32 %v212, %v226
  %v232 = vmul.f32 %v216, %v226
  %v233 = vmul.f32 %v220, %v226
  %v234 = vmul.f32 %v224, %v226
  %v235 = vadd.f32 %v186, %v227
  %v236 = vadd.f32 %v187, %v228
  %v237 = vadd.f32 %v188, %v229
  %v238 = vadd.f32 %v189, %v230
  %v239 = vadd.f32 %v190, %v231
  %v240 = vadd.f32 %v191, %v232
  %v241 = vadd.f32 %v192, %v233
  %v242 = vadd.f32 %v193, %v234
  %v243 = vmax.f32 %v235, 0.0
  %v244 = vmax.f32 %v236, 0.0
  %v245 = vmax.f32 %v237, 0.0
  %v246 = vmax.f32 %v238, 0.0
  %v247 = vmax.f32 %v239, 0.0
  %v248 = vmax.f32 %v240, 0.0
  %v249 = vmax.f32 %v241, 0.0
  %v250 = vmax.f32 %v242, 0.0
  %v251 = vld [vmem:[%s3] sm:$0xff]
  %v252 = vld [vmem:[%s3 + $0x8] sm:$0xff]
  %v253 = vld [vmem:[%s3 + $0x10] sm:$0xff]
  %v254 = vld [vmem:[%s3 + $0x18] sm:$0xff]
  %v255 = vld [vmem:[%s4] sm:$0x1]
  %v257 = vperm.slane %v255, 0
  %vm259 = vcmask 261120
  %v261 = vsel %vm259, %v243, 0
  %v264 = vsel %vm259, %v244, 0
  %v267 = vsel %vm259, %v245, 0
  %v270 = vsel %vm259, %v246, 0
  %v273 = vsel %vm259, %v247, 0
  %v276 = vsel %vm259, %v248, 0
  %v279 = vsel %vm259, %v249, 0
  %v282 = vsel %vm259, %v250, 0
  %284 = vmatpush.msra.mxu0 0.0
  %285 = vmatpush.msra.mxu0 0.0
  %286 = vmatpush.msra.mxu0 0.0
  %287 = vmatpush.msra.mxu0 0.0
  %288 = vmatpush.msra.mxu0 0.0
  %289 = vmatpush.msra.mxu0 0.0
  %290 = vmatpush.msra.mxu0 0.0
  %291 = vmatpush.msra.mxu0 0.0
  %292 = vmatpush.msra.mxu0 0.0
  %293 = vmatpush.msra.mxu0 0.0
  %294 = vmatpush.msra.mxu0 0.0
  %295 = vmatpush.msra.mxu0 0.0
  %296 = vmatpush.msra.mxu0 %v254
  %297 = vmatpush.msra.mxu0 %v253
  %298 = vmatpush.msra.mxu0 %v252
  %299 = vmatpush.msra.mxu0 %v251
  %300 = vmatmul.f32.gmra.mxu0 %v261
  %v301 = vpop.f32.mrf.mxu0
  %v302 = vadd.f32 %v257, %v301
  %303 = vmatmul.f32.gmra.mxu0 %v264
  %v304 = vpop.f32.mrf.mxu0
  %v305 = vadd.f32 %v257, %v304
  %306 = vmatmul.f32.gmra.mxu0 %v267
  %v307 = vpop.f32.mrf.mxu0
  %v308 = vadd.f32 %v257, %v307
  %309 = vmatmul.f32.gmra.mxu0 %v270
  %v310 = vpop.f32.mrf.mxu0
  %v311 = vadd.f32 %v257, %v310
  %312 = vmatmul.f32.gmra.mxu0 %v273
  %v313 = vpop.f32.mrf.mxu0
  %v314 = vadd.f32 %v257, %v313
  %315 = vmatmul.f32.gmra.mxu0 %v276
  %v316 = vpop.f32.mrf.mxu0
  %v317 = vadd.f32 %v257, %v316
  %318 = vmatmul.f32.gmra.mxu0 %v279
  %v319 = vpop.f32.mrf.mxu0
  %v320 = vadd.f32 %v257, %v319
  %321 = vmatmul.f32.gmra.mxu0 %v282
  %v322 = vpop.f32.mrf.mxu0
  %v323 = vadd.f32 %v257, %v322
  %324 = vdwg.mxu0
  %v325 = vmax.f32 %v302, 0.0
  %v326 = vmax.f32 %v305, 0.0
  %v327 = vmax.f32 %v308, 0.0
  %v328 = vmax.f32 %v311, 0.0
  %v329 = vmax.f32 %v314, 0.0
  %v330 = vmax.f32 %v317, 0.0
  %v331 = vmax.f32 %v320, 0.0
  %v332 = vmax.f32 %v323, 0.0
  %v333 = vld [vmem:[%s5] sm:$0xff]
  %v334 = vld [vmem:[%s5 + $0x8] sm:$0xff]
  %v335 = vld [vmem:[%s5 + $0x10] sm:$0xff]
  %v336 = vld [vmem:[%s5 + $0x18] sm:$0xff]
  %v337 = vld [vmem:[%s6] sm:$0x1]
  %v339 = vperm.slane %v337, 0
  %v342 = vsel %vm259, %v325, 0
  %v345 = vsel %vm259, %v326, 0
  %v348 = vsel %vm259, %v327, 0
  %v351 = vsel %vm259, %v328, 0
  %v354 = vsel %vm259, %v329, 0
  %v357 = vsel %vm259, %v330, 0
  %v360 = vsel %vm259, %v331, 0
  %v363 = vsel %vm259, %v332, 0
  %365 = vmatpush.msra.mxu0 0.0
  %366 = vmatpush.msra.mxu0 0.0
  %367 = vmatpush.msra.mxu0 0.0
  %368 = vmatpush.msra.mxu0 0.0
  %369 = vmatpush.msra.mxu0 0.0
  %370 = vmatpush.msra.mxu0 0.0
  %371 = vmatpush.msra.mxu0 0.0
  %372 = vmatpush.msra.mxu0 0.0
  %373 = vmatpush.msra.mxu0 0.0
  %374 = vmatpush.msra.mxu0 0.0
  %375 = vmatpush.msra.mxu0 0.0
  %376 = vmatpush.msra.mxu0 0.0
  %377 = vmatpush.msra.mxu0 %v336
  %378 = vmatpush.msra.mxu0 %v335
  %379 = vmatpush.msra.mxu0 %v334
  %380 = vmatpush.msra.mxu0 %v333
  %381 = vmatmul.f32.gmra.mxu0 %v342
  %v382 = vpop.f32.mrf.mxu0
  %v383 = vadd.f32 %v339, %v382
  %384 = vmatmul.f32.gmra.mxu0 %v345
  %v385 = vpop.f32.mrf.mxu0
  %v386 = vadd.f32 %v339, %v385
  %387 = vmatmul.f32.gmra.mxu0 %v348
  %v388 = vpop.f32.mrf.mxu0
  %v389 = vadd.f32 %v339, %v388
  %390 = vmatmul.f32.gmra.mxu0 %v351
  %v391 = vpop.f32.mrf.mxu0
  %v392 = vadd.f32 %v339, %v391
  %393 = vmatmul.f32.gmra.mxu0 %v354
  %v394 = vpop.f32.mrf.mxu0
  %v395 = vadd.f32 %v339, %v394
  %396 = vmatmul.f32.gmra.mxu0 %v357
  %v397 = vpop.f32.mrf.mxu0
  %v398 = vadd.f32 %v339, %v397
  %399 = vmatmul.f32.gmra.mxu0 %v360
  %v400 = vpop.f32.mrf.mxu0
  %v401 = vadd.f32 %v339, %v400
  %402 = vmatmul.f32.gmra.mxu0 %v363
  %v403 = vpop.f32.mrf.mxu0
  %v404 = vadd.f32 %v339, %v403
  %405 = vdwg.mxu0
  %vm406 = vcmask 64512
  %407 = vst.msk [vmem:[%s7] sm:$0xff] %vm406, %v383
  %408 = vst.msk [vmem:[%s7 + $0x8] sm:$0xff] %vm406, %v386
  %409 = vst.msk [vmem:[%s7 + $0x10] sm:$0xff] %vm406, %v389
  %410 = vst.msk [vmem:[%s7 + $0x18] sm:$0xff] %vm406, %v392
  %411 = vst.msk [vmem:[%s7 + $0x20] sm:$0xff] %vm406, %v395
  %412 = vst.msk [vmem:[%s7 + $0x28] sm:$0xff] %vm406, %v398
  %413 = vst.msk [vmem:[%s7 + $0x30] sm:$0xff] %vm406, %v401
  %414 = vst.msk [vmem:[%s7 + $0x38] sm:$0xff] %vm406, %v404
  // Predicated region
  $region30: #{tpu_custom_call.1} parent=0 // pred_check
    _
  $region31: #{tpu_custom_call.1} parent=0 // pred_check_branch
    %416 = sbr.rel (0) target = $region33
  $region32: #{tpu_custom_call.1} parent=0 // pred_region
    _
  $region33: #{tpu_custom_call.1} parent=0 // pred_fallthru
    _
  // Predicated region
  $region34: #{tpu_custom_call.1} parent=0 // pred_check
    _
  $region35: #{tpu_custom_call.1} parent=0 // pred_check_branch
    %418 = sbr.rel (0) target = $region37
  $region36: #{tpu_custom_call.1} parent=0 // pred_region
    _
  $region37: #{tpu_custom_call.1} parent=0 // pred_fallthru
    _

</llo_original>
